<compile_context>
chip_gen: v7x
topology: tpu7x:2x2x1
jax: 0.10.0
libtpu: 0.0.40
codegen_flags: <defaults>
</compile_context>

<pallas_src>
import jax
import jax.numpy as jnp
from jax.experimental import pallas as pl
from jax.experimental.pallas import tpu as pltpu

IN_DIM = 4
H1 = 128          # first hidden width
H2 = 64           # second hidden width (zero-padded to HP inside the kernel)
HP = 128          # lane-dense padded width used for h2
A_DIM = 2         # action head width
V_DIM = 1         # value head width
OUT_W = 8         # fused head output width (cols 0:2 action, 2:3 value, rest pad)


def _round_up(n, m):
    return (n + m - 1) // m * m


def policy_kernel(x_ref, w1_ref, w2_ref, wh_ref, b_ref, out_ref):
    # x_ref : (TB, 4)   f32     w1_ref: (4, 128)  f32
    # w2_ref: (128, 128) bf16   wh_ref: (128, 8)  bf16
    # b_ref : (3, 128)  f32     out_ref: (TB, 8)  f32
    x = x_ref[...]
    w1 = w1_ref[...]

    # Layer 1: K=4 contraction as 4 VPU broadcast-FMAs (keeps the MXU free).
    h1 = x[:, 0:1] * w1[0:1, :]
    for k in range(1, IN_DIM):
        h1 = h1 + x[:, k:k + 1] * w1[k:k + 1, :]
    h1 = jnp.maximum(h1 + b_ref[0:1, :], 0.0)                      # (TB, 128) f32

    # Layer 2 on the MXU: bf16 operands, f32 accumulate; bias/ReLU in f32.
    h2 = jnp.dot(h1.astype(jnp.bfloat16), w2_ref[...],
                 preferred_element_type=jnp.float32) + b_ref[1:2, :]
    h2 = jnp.maximum(h2, 0.0)                                      # (TB, 128), cols 64: are 0

    # Fused heads: narrow N=8 output -> single small (TB, 8) store.
    out_ref[...] = (jnp.dot(h2.astype(jnp.bfloat16), wh_ref[...],
                            preferred_element_type=jnp.float32)
                    + b_ref[2:3, :OUT_W])


def init_params(key):
    """Deterministic init matching the nn.Linear shapes (stored as (in, out))."""
    def linear(k, fan_in, fan_out):
        kw, kb = jax.random.split(k)
        bound = 1.0 / jnp.sqrt(fan_in)  # torch default U(-1/sqrt(in), 1/sqrt(in))
        w = jax.random.uniform(kw, (fan_in, fan_out), jnp.float32, -bound, bound)
        b = jax.random.uniform(kb, (1, fan_out), jnp.float32, -bound, bound)
        return w, b

    k1, k2, k3, k4 = jax.random.split(key, 4)
    w1, b1 = linear(k1, IN_DIM, H1)   # body[0]
    w2, b2 = linear(k2, H1, H2)       # body[2]
    wa, ba = linear(k3, H2, A_DIM)    # action_head
    wv, bv = linear(k4, H2, V_DIM)    # value_head
    return (w1, b1, w2, b2, wa, ba, wv, bv)


def pack_params(params):
    """Pack raw (PyTorch-layout-transposed) params into fused/padded kernel operands."""
    w1, b1, w2, b2, wa, ba, wv, bv = params

    # Hidden layer 2 zero-padded to 128 output columns (zero cols -> ReLU -> 0).
    w2p = jnp.zeros((H1, HP), jnp.float32).at[:, :H2].set(w2)

    # Fused head weight, only 8 output columns: [wa | wv | 0...]; rows 64:128
    # are zero (they only ever see the zero-padded h2 columns anyway).
    wh = jnp.zeros((HP, OUT_W), jnp.float32)
    wh = wh.at[:H2, 0:A_DIM].set(wa)
    wh = wh.at[:H2, A_DIM:A_DIM + V_DIM].set(wv)

    # All biases packed into one lane-dense (3, 128) f32 operand.  The head
    # bias sits in the first columns of row 2 (matching the shrunk output).
    biases = jnp.zeros((3, HP), jnp.float32)
    biases = biases.at[0, :].set(b1[0])
    biases = biases.at[1, :H2].set(b2[0])
    biases = biases.at[2, 0:A_DIM].set(ba[0])
    biases = biases.at[2, A_DIM:A_DIM + V_DIM].set(bv[0])

    # MXU operands in bf16 (f32 accumulation happens in-kernel); the rest f32.
    return (w1, w2p.astype(jnp.bfloat16), wh.astype(jnp.bfloat16), biases)


def _pick_grid(B):
    """Choose (steps, TB): one step for small batches, otherwise 2+ steps with
    padding < one tile (and >=2 blocks so v7x's two TCs can both engage)."""
    if B < 256:
        steps = 1
    else:
        steps = max(2, pl.cdiv(B, 2048))
    TB = _round_up(max(pl.cdiv(B, steps), 16), 16)
    return steps, TB


def policy_forward(x, packed_params):
    """x: (B, 4) float32 -> (action (B, 2), value (B, 1))."""
    w1, w2p, wh, biases = packed_params
    B = x.shape[0]

    steps, TB = _pick_grid(B)
    B_pad = steps * TB
    if B_pad != B:
        x = jnp.pad(x, ((0, B_pad - B), (0, 0)))

    out = pl.pallas_call(
        policy_kernel,
        out_shape=jax.ShapeDtypeStruct((B_pad, OUT_W), jnp.float32),
        grid=(steps,),
        in_specs=[
            pl.BlockSpec((TB, IN_DIM), lambda i: (i, 0)),    # x: tiled over batch
            pl.BlockSpec((IN_DIM, H1), lambda i: (0, 0)),    # w1 (f32, VPU layer)
            pl.BlockSpec((H1, HP),     lambda i: (0, 0)),    # w2 (bf16, padded)
            pl.BlockSpec((HP, OUT_W),  lambda i: (0, 0)),    # fused head weight (bf16)
            pl.BlockSpec((3, HP),      lambda i: (0, 0)),    # packed biases (f32)
        ],
        out_specs=pl.BlockSpec((TB, OUT_W), lambda i: (i, 0)),
        compiler_params=pltpu.CompilerParams(
            dimension_semantics=("parallel",),
        ),
    )(x, w1, w2p, wh, biases)

    action = out[:B, :A_DIM]
    value = out[:B, A_DIM:A_DIM + V_DIM]
    return action, value


def policy_forward_ref(x, params):
    """Pure-f32 reference matching the PyTorch module forward."""
    w1, b1, w2, b2, wa, ba, wv, bv = params
    h1 = jnp.maximum(x @ w1 + b1, 0.0)
    h2 = jnp.maximum(h1 @ w2 + b2, 0.0)
    return h2 @ wa + ba, h2 @ wv + bv


if __name__ == "__main__":
    key = jax.random.PRNGKey(0)
    kx, kp = jax.random.split(key)

    params = init_params(kp)
    packed = pack_params(params)

    # Small batch (CartPole-style states) plus a larger, non-multiple batch to
    # exercise the single-step path and the 2-step grid + padding path.
    for B in (8, 1030):
        x = jax.random.normal(jax.random.fold_in(kx, B), (B, IN_DIM), jnp.float32)

        action, value = policy_forward(x, packed)
        action, value = jax.block_until_ready((action, value))

        action_ref, value_ref = policy_forward_ref(x, params)
        assert action.shape == (B, A_DIM) and value.shape == (B, V_DIM)
        # bf16 MXU operands -> validate at ~1e-2 scale vs the f32 reference.
        assert jnp.allclose(action, action_ref, atol=2e-2, rtol=2e-2)
        assert jnp.allclose(value, value_ref, atol=2e-2, rtol=2e-2)

    print("KERNEL_OK")
</pallas_src>

<mosaic_0001>
module attributes {stable_mosaic.version = 11 : i64} {
  func.func @policy_kernel(%arg0: i32, %arg1: memref<16x4xf32, #tpu.memory_space<vmem>>, %arg2: memref<4x128xf32, #tpu.memory_space<vmem>>, %arg3: memref<128x128xbf16, #tpu.memory_space<vmem>>, %arg4: memref<128x8xbf16, #tpu.memory_space<vmem>>, %arg5: memref<3x128xf32, #tpu.memory_space<vmem>>, %arg6: memref<16x8xf32, #tpu.memory_space<vmem>>) attributes {dimension_semantics = [#tpu.dimension_semantics<parallel>], iteration_bounds = array<i64: 1>, scalar_prefetch = 0 : i64, scratch_operands = 0 : i64, tpu.core_type = #tpu.core_type<tc>, window_params = [{transform_indices = @transform_0, window_bounds = array<i64: 16, 4>}, {pipeline_mode = #tpu.pipeline_mode<synchronous>, transform_indices = @transform_1, window_bounds = array<i64: 4, 128>}, {pipeline_mode = #tpu.pipeline_mode<synchronous>, transform_indices = @transform_2, window_bounds = array<i64: 128, 128>}, {pipeline_mode = #tpu.pipeline_mode<synchronous>, transform_indices = @transform_3, window_bounds = array<i64: 128, 8>}, {pipeline_mode = #tpu.pipeline_mode<synchronous>, transform_indices = @transform_4, window_bounds = array<i64: 3, 128>}, {transform_indices = @transform_5, window_bounds = array<i64: 16, 8>}]} {
    %c0 = arith.constant 0 : index
    %c0_0 = arith.constant 0 : index
    %0 = vector.load %arg1[%c0, %c0_0] : memref<16x4xf32, #tpu.memory_space<vmem>>, vector<16x4xf32>
    %c0_1 = arith.constant 0 : index
    %c0_2 = arith.constant 0 : index
    %1 = vector.load %arg2[%c0_1, %c0_2] : memref<4x128xf32, #tpu.memory_space<vmem>>, vector<4x128xf32>
    %2 = vector.extract_strided_slice %0 {offsets = [0, 0], sizes = [16, 1], strides = [1, 1]} : vector<16x4xf32> to vector<16x1xf32>
    %3 = vector.extract_strided_slice %1 {offsets = [0, 0], sizes = [1, 128], strides = [1, 1]} : vector<4x128xf32> to vector<1x128xf32>
    %4 = vector.broadcast %2 : vector<16x1xf32> to vector<16x128xf32>
    %5 = vector.broadcast %3 : vector<1x128xf32> to vector<16x128xf32>
    %6 = arith.mulf %4, %5 : vector<16x128xf32>
    %7 = vector.extract_strided_slice %0 {offsets = [0, 1], sizes = [16, 1], strides = [1, 1]} : vector<16x4xf32> to vector<16x1xf32>
    %8 = vector.extract_strided_slice %1 {offsets = [1, 0], sizes = [1, 128], strides = [1, 1]} : vector<4x128xf32> to vector<1x128xf32>
    %9 = vector.broadcast %7 : vector<16x1xf32> to vector<16x128xf32>
    %10 = vector.broadcast %8 : vector<1x128xf32> to vector<16x128xf32>
    %11 = arith.mulf %9, %10 : vector<16x128xf32>
    %12 = arith.addf %6, %11 : vector<16x128xf32>
    %13 = vector.extract_strided_slice %0 {offsets = [0, 2], sizes = [16, 1], strides = [1, 1]} : vector<16x4xf32> to vector<16x1xf32>
    %14 = vector.extract_strided_slice %1 {offsets = [2, 0], sizes = [1, 128], strides = [1, 1]} : vector<4x128xf32> to vector<1x128xf32>
    %15 = vector.broadcast %13 : vector<16x1xf32> to vector<16x128xf32>
    %16 = vector.broadcast %14 : vector<1x128xf32> to vector<16x128xf32>
    %17 = arith.mulf %15, %16 : vector<16x128xf32>
    %18 = arith.addf %12, %17 : vector<16x128xf32>
    %19 = vector.extract_strided_slice %0 {offsets = [0, 3], sizes = [16, 1], strides = [1, 1]} : vector<16x4xf32> to vector<16x1xf32>
    %20 = vector.extract_strided_slice %1 {offsets = [3, 0], sizes = [1, 128], strides = [1, 1]} : vector<4x128xf32> to vector<1x128xf32>
    %21 = vector.broadcast %19 : vector<16x1xf32> to vector<16x128xf32>
    %22 = vector.broadcast %20 : vector<1x128xf32> to vector<16x128xf32>
    %23 = arith.mulf %21, %22 : vector<16x128xf32>
    %24 = arith.addf %18, %23 : vector<16x128xf32>
    %c0_3 = arith.constant 0 : index
    %c0_4 = arith.constant 0 : index
    %25 = vector.load %arg5[%c0_3, %c0_4] : memref<3x128xf32, #tpu.memory_space<vmem>>, vector<1x128xf32>
    %26 = vector.broadcast %25 : vector<1x128xf32> to vector<16x128xf32>
    %27 = arith.addf %24, %26 : vector<16x128xf32>
    %cst = arith.constant 0.000000e+00 : f32
    %28 = vector.broadcast %cst : f32 to vector<16x128xf32>
    %29 = arith.maximumf %27, %28 : vector<16x128xf32>
    %30 = arith.truncf %29 : vector<16x128xf32> to vector<16x128xbf16>
    %c0_5 = arith.constant 0 : index
    %c0_6 = arith.constant 0 : index
    %31 = vector.load %arg3[%c0_5, %c0_6] : memref<128x128xbf16, #tpu.memory_space<vmem>>, vector<128x128xbf16>
    %cst_7 = arith.constant dense<0.000000e+00> : vector<16x128xf32>
    %32 = tpu.matmul %30, %31, %cst_7 {dimension_numbers = #tpu.dot_dimension_numbers<[1], [0], [0], [1], [0, 0, 1, 1], [], []>} : vector<16x128xbf16>, vector<128x128xbf16>, vector<16x128xf32> -> vector<16x128xf32>
    %c1 = arith.constant 1 : index
    %c0_8 = arith.constant 0 : index
    %33 = vector.load %arg5[%c1, %c0_8] : memref<3x128xf32, #tpu.memory_space<vmem>>, vector<1x128xf32>
    %34 = vector.broadcast %33 : vector<1x128xf32> to vector<16x128xf32>
    %35 = arith.addf %32, %34 : vector<16x128xf32>
    %cst_9 = arith.constant 0.000000e+00 : f32
    %36 = vector.broadcast %cst_9 : f32 to vector<16x128xf32>
    %37 = arith.maximumf %35, %36 : vector<16x128xf32>
    %38 = arith.truncf %37 : vector<16x128xf32> to vector<16x128xbf16>
    %c0_10 = arith.constant 0 : index
    %c0_11 = arith.constant 0 : index
    %39 = vector.load %arg4[%c0_10, %c0_11] : memref<128x8xbf16, #tpu.memory_space<vmem>>, vector<128x8xbf16>
    %cst_12 = arith.constant dense<0.000000e+00> : vector<16x8xf32>
    %40 = tpu.matmul %38, %39, %cst_12 {dimension_numbers = #tpu.dot_dimension_numbers<[1], [0], [0], [1], [0, 0, 1, 1], [], []>} : vector<16x128xbf16>, vector<128x8xbf16>, vector<16x8xf32> -> vector<16x8xf32>
    %c2 = arith.constant 2 : index
    %c0_13 = arith.constant 0 : index
    %41 = vector.load %arg5[%c2, %c0_13] : memref<3x128xf32, #tpu.memory_space<vmem>>, vector<1x8xf32>
    %42 = vector.broadcast %41 : vector<1x8xf32> to vector<16x8xf32>
    %43 = arith.addf %40, %42 : vector<16x8xf32>
    %c0_14 = arith.constant 0 : index
    %c0_15 = arith.constant 0 : index
    %44 = vector.load %arg6[%c0_14, %c0_15] : memref<16x8xf32, #tpu.memory_space<vmem>>, vector<16x8xf32>
    tpu.vector_store %arg6[%c0_14, %c0_15], %43 {strides = array<i32>} : memref<16x8xf32, #tpu.memory_space<vmem>>, vector<16x8xf32>,
    return
  }
  func.func @transform_0(%arg0: i32) -> (i32, i32) {
    %c0_i32 = arith.constant 0 : i32
    %c0_i32_0 = arith.constant 0 : i32
    return %arg0, %c0_i32 : i32, i32
  }
  func.func @transform_1(%arg0: i32) -> (i32, i32) {
    %c0_i32 = arith.constant 0 : i32
    %c0_i32_0 = arith.constant 0 : i32
    %c0_i32_1 = arith.constant 0 : i32
    return %c0_i32, %c0_i32_0 : i32, i32
  }
  func.func @transform_2(%arg0: i32) -> (i32, i32) {
    %c0_i32 = arith.constant 0 : i32
    %c0_i32_0 = arith.constant 0 : i32
    %c0_i32_1 = arith.constant 0 : i32
    return %c0_i32, %c0_i32_0 : i32, i32
  }
  func.func @transform_3(%arg0: i32) -> (i32, i32) {
    %c0_i32 = arith.constant 0 : i32
    %c0_i32_0 = arith.constant 0 : i32
    %c0_i32_1 = arith.constant 0 : i32
    return %c0_i32, %c0_i32_0 : i32, i32
  }
  func.func @transform_4(%arg0: i32) -> (i32, i32) {
    %c0_i32 = arith.constant 0 : i32
    %c0_i32_0 = arith.constant 0 : i32
    %c0_i32_1 = arith.constant 0 : i32
    return %c0_i32, %c0_i32_0 : i32, i32
  }
  func.func @transform_5(%arg0: i32) -> (i32, i32) {
    %c0_i32 = arith.constant 0 : i32
    %c0_i32_0 = arith.constant 0 : i32
    return %arg0, %c0_i32 : i32, i32
  }
}

</mosaic_0001>

<llo_original>
// kernel: tpu_custom_call.1
$region0: #{tpu_custom_call.1}
  #allocation0 [shape = 'u32[]', space=smem, size = 0x4, offset = 0x4, fixed_abs, tag = 'smem constant byte address 0x4 - core index']
  #allocation1 [shape = 'u32[144,128]{1,0:T(1,128)}', space=vmem, size = 0x12000, scoped, tag = 'internal scratch']
  %s0 = inlined_call_operand.vmem [shape: f32[16,4], index: 0, kind: input, shape index: {}]
  %s1 = inlined_call_operand.vmem [shape: f32[4,128], index: 1, kind: input, shape index: {}]
  %s2 = inlined_call_operand.vmem [shape: bf16[128,128], index: 2, kind: input, shape index: {}]
  %s3 = inlined_call_operand.vmem [shape: bf16[128,8], index: 3, kind: input, shape index: {}]
  %s4 = inlined_call_operand.vmem [shape: f32[3,128], index: 4, kind: input, shape index: {}]
  %s5 = inlined_call_operand.vmem [shape: f32[16,8], index: 5, kind: output, shape index: {}]
  %s6 = sld [smem:[#allocation0]]
  $region30: #{tpu_custom_call.1} parent=0
    _
  %s8 = ssub.s32 1, %s6
  %s9 = scalar_select 0, %s8, %s6
  // Predicated region
  $region2: #{tpu_custom_call.1} parent=0 // pred_check
    _
  $region3: #{tpu_custom_call.1} parent=0 // pred_check_branch
    %11 = sbr.rel (0) target = $region5
  $region4: #{tpu_custom_call.1} parent=0 // pred_region
    _
  $region5: #{tpu_custom_call.1} parent=0 // pred_fallthru
    _
  // Predicated region
  $region6: #{tpu_custom_call.1} parent=0 // pred_check
    _
  $region7: #{tpu_custom_call.1} parent=0 // pred_check_branch
    %13 = sbr.rel (0) target = $region9
  $region8: #{tpu_custom_call.1} parent=0 // pred_region
    _
  $region9: #{tpu_custom_call.1} parent=0 // pred_fallthru
    _
  // Predicated region
  $region10: #{tpu_custom_call.1} parent=0 // pred_check
    _
  $region11: #{tpu_custom_call.1} parent=0 // pred_check_branch
    %15 = sbr.rel (0) target = $region13
  $region12: #{tpu_custom_call.1} parent=0 // pred_region
    _
  $region13: #{tpu_custom_call.1} parent=0 // pred_fallthru
    _
  // Predicated region
  $region14: #{tpu_custom_call.1} parent=0 // pred_check
    _
  $region15: #{tpu_custom_call.1} parent=0 // pred_check_branch
    %17 = sbr.rel (0) target = $region17
  $region16: #{tpu_custom_call.1} parent=0 // pred_region
    _
  $region17: #{tpu_custom_call.1} parent=0 // pred_fallthru
    _
  // Predicated region
  $region18: #{tpu_custom_call.1} parent=0 // pred_check
    _
  $region19: #{tpu_custom_call.1} parent=0 // pred_check_branch
    %19 = sbr.rel (0) target = $region21
  $region20: #{tpu_custom_call.1} parent=0 // pred_region
    _
  $region21: #{tpu_custom_call.1} parent=0 // pred_fallthru
    _
  %v21 = vld [vmem:[%s0] sm:$0xff]
  %v22 = vld [vmem:[%s0 + $0x8] sm:$0xff]
  %v23 = vld [vmem:[%s1] sm:$0xf]
  %25 = vset.pattern.permute.xlu0 0
  %26 = vperm.xlu0 %25, %v21
  %v27 = vpop.permute.xlu0 %26
  %30 = vset.pattern.permute.xlu0 0
  %31 = vperm.xlu0 %30, %v22
  %v32 = vpop.permute.xlu0 %31
  %v34 = vlaneseq
  %v35 = vshrl.u32 %v34, 7
  %v36 = vsub.s32 0, %v35
  %v37 = vrot.slane %v23, %v36
  %v38 = vmul.f32 %v27, %v37
  %v39 = vmul.f32 %v32, %v37
  %40 = vset.pattern.permute.xlu0 1
  %41 = vperm.xlu0 %40, %v21
  %v42 = vpop.permute.xlu0 %41
  %44 = vset.pattern.permute.xlu0 1
  %45 = vperm.xlu0 %44, %v22
  %v46 = vpop.permute.xlu0 %45
  %v48 = vlaneseq
  %v49 = vshrl.u32 %v48, 7
  %v50 = vsub.s32 1, %v49
  %v51 = vrot.slane %v23, %v50
  %v52 = vmul.f32 %v42, %v51
  %v53 = vmul.f32 %v46, %v51
  %v54 = vadd.f32 %v38, %v52
  %v55 = vadd.f32 %v39, %v53
  %56 = vset.pattern.permute.xlu0 2
  %57 = vperm.xlu0 %56, %v21
  %v58 = vpop.permute.xlu0 %57
  %60 = vset.pattern.permute.xlu0 2
  %61 = vperm.xlu0 %60, %v22
  %v62 = vpop.permute.xlu0 %61
  %v64 = vlaneseq
  %v65 = vshrl.u32 %v64, 7
  %v66 = vsub.s32 2, %v65
  %v67 = vrot.slane %v23, %v66
  %v68 = vmul.f32 %v58, %v67
  %v69 = vmul.f32 %v62, %v67
  %v70 = vadd.f32 %v54, %v68
  %v71 = vadd.f32 %v55, %v69
  %72 = vset.pattern.permute.xlu0 3
  %73 = vperm.xlu0 %72, %v21
  %v74 = vpop.permute.xlu0 %73
  %76 = vset.pattern.permute.xlu0 3
  %77 = vperm.xlu0 %76, %v22
  %v78 = vpop.permute.xlu0 %77
  %v80 = vlaneseq
  %v81 = vshrl.u32 %v80, 7
  %v82 = vsub.s32 3, %v81
  %v83 = vrot.slane %v23, %v82
  %v84 = vmul.f32 %v74, %v83
  %v85 = vmul.f32 %v78, %v83
  %v86 = vadd.f32 %v70, %v84
  %v87 = vadd.f32 %v71, %v85
  %v88 = vld [vmem:[%s4] sm:$0x1]
  %v89 = vlaneseq
  %v90 = vshrl.u32 %v89, 7
  %v91 = vsub.s32 0, %v90
  %v92 = vrot.slane %v88, %v91
  %v93 = vadd.f32 %v86, %v92
  %v94 = vadd.f32 %v87, %v92
  %v95 = vmax.f32 %v93, 0.0
  %v96 = vmax.f32 %v94, 0.0
  %v97 = vpack.c.bf16 %v96, %v95
  %v98 = vld [vmem:[%s2] sm:$0xf]
  %v99 = vld [vmem:[%s2 + $0x4] sm:$0xf]
  %v100 = vld [vmem:[%s2 + $0x8] sm:$0xf]
  %v101 = vld [vmem:[%s2 + $0xc] sm:$0xf]
  %v102 = vld [vmem:[%s2 + $0x10] sm:$0xf]
  %v103 = vld [vmem:[%s2 + $0x14] sm:$0xf]
  %v104 = vld [vmem:[%s2 + $0x18] sm:$0xf]
  %v105 = vld [vmem:[%s2 + $0x1c] sm:$0xf]
  %v106 = vld [vmem:[%s2 + $0x20] sm:$0xf]
  %v107 = vld [vmem:[%s2 + $0x24] sm:$0xf]
  %v108 = vld [vmem:[%s2 + $0x28] sm:$0xf]
  %v109 = vld [vmem:[%s2 + $0x2c] sm:$0xf]
  %v110 = vld [vmem:[%s2 + $0x30] sm:$0xf]
  %v111 = vld [vmem:[%s2 + $0x34] sm:$0xf]
  %v112 = vld [vmem:[%s2 + $0x38] sm:$0xf]
  %v113 = vld [vmem:[%s2 + $0x3c] sm:$0xf]
  %v114 = vld [vmem:[%s4 + $0x1] sm:$0x1]
  %v115 = vlaneseq
  %v116 = vshrl.u32 %v115, 7
  %v117 = vsub.s32 0, %v116
  %v118 = vrot.slane %v114, %v117
  %v135 = vunpack.c.l.b16 %v98
  %v136 = vunpack.c.l.b16 %v99
  %v137 = vunpack.c.l.b16 %v100
  %v138 = vunpack.c.l.b16 %v101
  %v139 = vunpack.c.l.b16 %v102
  %v140 = vunpack.c.l.b16 %v103
  %v141 = vunpack.c.l.b16 %v104
  %v142 = vunpack.c.l.b16 %v105
  %v143 = vunpack.c.l.b16 %v106
  %v144 = vunpack.c.l.b16 %v107
  %v145 = vunpack.c.l.b16 %v108
  %v146 = vunpack.c.l.b16 %v109
  %v147 = vunpack.c.l.b16 %v110
  %v148 = vunpack.c.l.b16 %v111
  %v149 = vunpack.c.l.b16 %v112
  %v150 = vunpack.c.l.b16 %v113
  %v151 = vpack.c.b16 %v136, %v135
  %v152 = vpack.c.b16 %v138, %v137
  %v153 = vpack.c.b16 %v140, %v139
  %v154 = vpack.c.b16 %v142, %v141
  %v155 = vpack.c.b16 %v144, %v143
  %v156 = vpack.c.b16 %v146, %v145
  %v157 = vpack.c.b16 %v148, %v147
  %v158 = vpack.c.b16 %v150, %v149
  %167 = vmatprep.subr.bf16.mxu0 0
  %168 = vmatpush1.bf16.msra.mxu0 %v151
  %169 = vmatprep.subr.bf16.mxu0 0
  %170 = vmatpush1.bf16.msra.mxu0 %v152
  %171 = vmatprep.subr.bf16.mxu0 0
  %172 = vmatpush1.bf16.msra.mxu0 %v153
  %173 = vmatprep.subr.bf16.mxu0 0
  %174 = vmatpush1.bf16.msra.mxu0 %v154
  %175 = vmatprep.subr.bf16.mxu0 0
  %176 = vmatpush1.bf16.msra.mxu0 %v155
  %177 = vmatprep.subr.bf16.mxu0 0
  %178 = vmatpush1.bf16.msra.mxu0 %v156
  %179 = vmatprep.subr.bf16.mxu0 0
  %180 = vmatpush1.bf16.msra.mxu0 %v157
  %181 = vmatprep.subr.bf16.mxu0 0
  %182 = vmatpush1.bf16.msra.mxu0 %v158
  %183 = vmatprep.subr.bf16.mxu0 0
  %184 = vmatpush1.bf16.msra.mxu0 0
  %185 = vmatprep.subr.bf16.mxu0 0
  %186 = vmatpush1.bf16.msra.mxu0 0
  %187 = vmatprep.subr.bf16.mxu0 0
  %188 = vmatpush1.bf16.msra.mxu0 0
  %189 = vmatprep.subr.bf16.mxu0 0
  %190 = vmatpush1.bf16.msra.mxu0 0
  %191 = vmatprep.subr.bf16.mxu0 0
  %192 = vmatpush1.bf16.msra.mxu0 0
  %193 = vmatprep.subr.bf16.mxu0 0
  %194 = vmatpush1.bf16.msra.mxu0 0
  %195 = vmatprep.subr.bf16.mxu0 0
  %196 = vmatpush1.bf16.msra.mxu0 0
  %197 = vmatprep.subr.bf16.mxu0 0
  %198 = vmatpush1.bf16.msra.mxu0 0
  %199 = vmatprep.mubr.bf16.mxu0 0
  %200 = vmatmul.mubr.bf16.gmra.mrb[0].mxu0 %v97
  %v201 = vpop.f32.mrb[0].mxu0
  %v202 = vadd.f32 %v118, %v201
  %v203 = vpop.f32.mrb[0].mxu0
  %v204 = vpop.f32.mrb[0].mxu0
  %v205 = vadd.f32 %v118, %v204
  %v206 = vpop.f32.mrb[0].mxu0
  %207 = vdwg.mxu0
  %v208 = vmax.f32 %v202, 0.0
  %v209 = vmax.f32 %v205, 0.0
  %v210 = vpack.c.bf16 %v209, %v208
  %v211 = vld [vmem:[%s3] sm:$0xf]
  %v212 = vld [vmem:[%s3 + $0x4] sm:$0xf]
  %v213 = vld [vmem:[%s3 + $0x8] sm:$0xf]
  %v214 = vld [vmem:[%s3 + $0xc] sm:$0xf]
  %v215 = vld [vmem:[%s3 + $0x10] sm:$0xf]
  %v216 = vld [vmem:[%s3 + $0x14] sm:$0xf]
  %v217 = vld [vmem:[%s3 + $0x18] sm:$0xf]
  %v218 = vld [vmem:[%s3 + $0x1c] sm:$0xf]
  %v219 = vld [vmem:[%s3 + $0x20] sm:$0xf]
  %v220 = vld [vmem:[%s3 + $0x24] sm:$0xf]
  %v221 = vld [vmem:[%s3 + $0x28] sm:$0xf]
  %v222 = vld [vmem:[%s3 + $0x2c] sm:$0xf]
  %v223 = vld [vmem:[%s3 + $0x30] sm:$0xf]
  %v224 = vld [vmem:[%s3 + $0x34] sm:$0xf]
  %v225 = vld [vmem:[%s3 + $0x38] sm:$0xf]
  %v226 = vld [vmem:[%s3 + $0x3c] sm:$0xf]
  %v227 = vld [vmem:[%s4 + $0x2] sm:$0x1]
  %v228 = vlaneseq
  %v229 = vshrl.u32 %v228, 7
  %v230 = vsub.s32 0, %v229
  %v231 = vrot.slane %v227, %v230
  %v248 = vunpack.c.l.b16 %v211
  %v249 = vunpack.c.l.b16 %v212
  %v250 = vunpack.c.l.b16 %v213
  %v251 = vunpack.c.l.b16 %v214
  %v252 = vunpack.c.l.b16 %v215
  %v253 = vunpack.c.l.b16 %v216
  %v254 = vunpack.c.l.b16 %v217
  %v255 = vunpack.c.l.b16 %v218
  %v256 = vunpack.c.l.b16 %v219
  %v257 = vunpack.c.l.b16 %v220
  %v258 = vunpack.c.l.b16 %v221
  %v259 = vunpack.c.l.b16 %v222
  %v260 = vunpack.c.l.b16 %v223
  %v261 = vunpack.c.l.b16 %v224
  %v262 = vunpack.c.l.b16 %v225
  %v263 = vunpack.c.l.b16 %v226
  %v264 = vpack.c.b16 %v249, %v248
  %v265 = vpack.c.b16 %v251, %v250
  %v266 = vpack.c.b16 %v253, %v252
  %v267 = vpack.c.b16 %v255, %v254
  %v268 = vpack.c.b16 %v257, %v256
  %v269 = vpack.c.b16 %v259, %v258
  %v270 = vpack.c.b16 %v261, %v260
  %v271 = vpack.c.b16 %v263, %v262
  %280 = vmatprep.subr.bf16.mxu0 0
  %281 = vmatpush1.bf16.msra.mxu0 %v264
  %282 = vmatprep.subr.bf16.mxu0 0
  %283 = vmatpush1.bf16.msra.mxu0 %v265
  %284 = vmatprep.subr.bf16.mxu0 0
  %285 = vmatpush1.bf16.msra.mxu0 %v266
  %286 = vmatprep.subr.bf16.mxu0 0
  %287 = vmatpush1.bf16.msra.mxu0 %v267
  %288 = vmatprep.subr.bf16.mxu0 0
  %289 = vmatpush1.bf16.msra.mxu0 %v268
  %290 = vmatprep.subr.bf16.mxu0 0
  %291 = vmatpush1.bf16.msra.mxu0 %v269
  %292 = vmatprep.subr.bf16.mxu0 0
  %293 = vmatpush1.bf16.msra.mxu0 %v270
  %294 = vmatprep.subr.bf16.mxu0 0
  %295 = vmatpush1.bf16.msra.mxu0 %v271
  %296 = vmatprep.subr.bf16.mxu0 0
  %297 = vmatpush1.bf16.msra.mxu0 0
  %298 = vmatprep.subr.bf16.mxu0 0
  %299 = vmatpush1.bf16.msra.mxu0 0
  %300 = vmatprep.subr.bf16.mxu0 0
  %301 = vmatpush1.bf16.msra.mxu0 0
  %302 = vmatprep.subr.bf16.mxu0 0
  %303 = vmatpush1.bf16.msra.mxu0 0
  %304 = vmatprep.subr.bf16.mxu0 0
  %305 = vmatpush1.bf16.msra.mxu0 0
  %306 = vmatprep.subr.bf16.mxu0 0
  %307 = vmatpush1.bf16.msra.mxu0 0
  %308 = vmatprep.subr.bf16.mxu0 0
  %309 = vmatpush1.bf16.msra.mxu0 0
  %310 = vmatprep.subr.bf16.mxu0 0
  %311 = vmatpush1.bf16.msra.mxu0 0
  %312 = vmatprep.mubr.bf16.mxu0 0
  %313 = vmatmul.mubr.bf16.gmra.mrb[0].mxu0 %v210
  %v314 = vpop.f32.mrb[0].mxu0
  %v315 = vadd.f32 %v231, %v314
  %v316 = vpop.f32.mrb[0].mxu0
  %v317 = vpop.f32.mrb[0].mxu0
  %v318 = vadd.f32 %v231, %v317
  %v319 = vpop.f32.mrb[0].mxu0
  %320 = vdwg.mxu0
  %vm321 = vcmask 64512
  %322 = vst.msk [vmem:[%s5] sm:$0xff] %vm321, %v315
  %323 = vst.msk [vmem:[%s5 + $0x8] sm:$0xff] %vm321, %v318
  // Predicated region
  $region22: #{tpu_custom_call.1} parent=0 // pred_check
    _
  $region23: #{tpu_custom_call.1} parent=0 // pred_check_branch
    %325 = sbr.rel (0) target = $region25
  $region24: #{tpu_custom_call.1} parent=0 // pred_region
    _
  $region25: #{tpu_custom_call.1} parent=0 // pred_fallthru
    _
  // Predicated region
  $region26: #{tpu_custom_call.1} parent=0 // pred_check
    _
  $region27: #{tpu_custom_call.1} parent=0 // pred_check_branch
    %327 = sbr.rel (0) target = $region29
  $region28: #{tpu_custom_call.1} parent=0 // pred_region
    _
  $region29: #{tpu_custom_call.1} parent=0 // pred_fallthru
    _

</llo_original>
